<compile_context>
chip_gen: v7x
topology: tpu7x:2x2x1
jax: 0.10.0
libtpu: 0.0.40
codegen_flags: <defaults>
</compile_context>

<pallas_src>
import jax
import jax.numpy as jnp
from jax.experimental import pallas as pl
from jax.experimental.pallas import tpu as pltpu


def _round_up(a, b):
    return ((a + b - 1) // b) * b


def _make_reciprocal_kernel(lower_bound, output_scale, max_value):
    lb = float(lower_bound)
    out_scale = float(output_scale)
    inv_out_scale = 1.0 / out_scale
    mv = None if max_value is None else abs(float(max_value))

    def reciprocal_kernel(x_ref, o_ref):
        x = x_ref[...]

        # ---- _clip_input: keep |x| >= lower_bound, preserving sign ----
        clamped = jnp.where(x >= 0.0, jnp.maximum(x, lb), jnp.minimum(x, -lb))

        # ---- reciprocal (exact; matches torch.reciprocal) ----
        y = 1.0 / clamped

        # ---- optional clamp from max_value (simulated_func variant) ----
        if mv is not None:
            y = jnp.clip(y, -mv, mv)

        # ---- symmetric int8 fake-quantize (activation_post_process) ----
        q = jnp.clip(jnp.round(y * inv_out_scale), -128.0, 127.0)
        o_ref[...] = (q * out_scale).astype(o_ref.dtype)

    return reciprocal_kernel


def qat_reciprocal(x_nchw, *, input_scale, output_scale, max_value=None,
                   lanes=512, tile_rows=1024):
    """QAT Reciprocal forward. x_nchw: float32 NCHW tensor (elementwise)."""
    orig_shape = x_nchw.shape
    n = x_nchw.size

    # ---- flatten to a wide, lane-dense 2-D slab --------------------------
    rows_needed = -(-n // lanes)

    # Effective tile: big blocks for big tensors (amortize ~0.35us/step and
    # reach the flat part of the HBM throughput curve), but keep >= 2 grid
    # steps when possible so v7x can shard the parallel axis over its 2 TCs.
    if rows_needed >= 2 * tile_rows:
        tr = tile_rows
    elif rows_needed >= 16:
        tr = _round_up(max(rows_needed // 2, 8), 8)
    else:
        tr = 8
    padded_rows = _round_up(max(rows_needed, tr), tr)
    grid = padded_rows // tr
    padded_elems = padded_rows * lanes

    flat = x_nchw.reshape(-1)
    if padded_elems != n:
        # pad with 1.0 (harmless for reciprocal); padding is sliced off below
        flat = jnp.concatenate(
            [flat, jnp.ones((padded_elems - n,), dtype=flat.dtype)])
    x2d = flat.reshape(padded_rows, lanes)

    # input lower bound: q_scale * 1 for qint8 inputs (see _clip_input)
    kernel = _make_reciprocal_kernel(input_scale * 1.0, output_scale, max_value)

    out2d = pl.pallas_call(
        kernel,
        out_shape=jax.ShapeDtypeStruct((padded_rows, lanes), x2d.dtype),
        grid=(grid,),
        in_specs=[pl.BlockSpec((tr, lanes), lambda i: (i, 0))],
        out_specs=pl.BlockSpec((tr, lanes), lambda i: (i, 0)),
        compiler_params=pltpu.CompilerParams(
            dimension_semantics=("parallel",)),
    )(x2d)

    return out2d.reshape(-1)[:n].reshape(orig_shape)


def _reference(x, input_scale, output_scale, max_value=None):
    lb = input_scale
    clamped = jnp.where(x >= 0.0, jnp.maximum(x, lb), jnp.minimum(x, -lb))
    y = 1.0 / clamped
    if max_value is not None:
        y = jnp.clip(y, -abs(max_value), abs(max_value))
    q = jnp.clip(jnp.round(y * (1.0 / output_scale)), -128.0, 127.0)
    return q * output_scale


if __name__ == "__main__":
    key = jax.random.PRNGKey(0)
    B, C, H, W = 2, 4, 16, 16  # NCHW, 2048 elems
    x = jax.random.normal(key, (B, C, H, W), dtype=jnp.float32) * 2.0

    # Deterministic "quantization parameters" (no checkpoint load):
    input_scale = 0.05                       # simulated q_scale of qint8 input
    max_value = None                         # default Reciprocal(max_value=None)
    # output range is [-1/lb, 1/lb] after input clipping -> symmetric int8 scale
    output_scale = (1.0 / input_scale) / 127.0

    out = qat_reciprocal(x, input_scale=input_scale,
                         output_scale=output_scale, max_value=max_value)
    out = jax.block_until_ready(out)

    ref = _reference(x, input_scale, output_scale, max_value)
    assert out.shape == x.shape and out.dtype == x.dtype
    assert jnp.allclose(out, ref, rtol=1e-5, atol=1e-5), "mismatch vs reference"

    print("KERNEL_OK")
</pallas_src>

<mosaic_0001>
module attributes {stable_mosaic.version = 11 : i64} {
  func.func @reciprocal_kernel(%arg0: i32, %arg1: memref<8x512xf32, #tpu.memory_space<vmem>>, %arg2: memref<8x512xf32, #tpu.memory_space<vmem>>) attributes {dimension_semantics = [#tpu.dimension_semantics<parallel>], iteration_bounds = array<i64: 1>, scalar_prefetch = 0 : i64, scratch_operands = 0 : i64, tpu.core_type = #tpu.core_type<tc>, window_params = [{transform_indices = @transform_0, window_bounds = array<i64: 8, 512>}, {transform_indices = @transform_1, window_bounds = array<i64: 8, 512>}]} {
    %c0 = arith.constant 0 : index
    %c0_0 = arith.constant 0 : index
    %0 = vector.load %arg1[%c0, %c0_0] : memref<8x512xf32, #tpu.memory_space<vmem>>, vector<8x512xf32>
    %cst = arith.constant 0.000000e+00 : f32
    %1 = vector.broadcast %cst : f32 to vector<8x512xf32>
    %2 = arith.cmpf oge, %0, %1 : vector<8x512xf32>
    %cst_1 = arith.constant 5.000000e-02 : f32
    %3 = vector.broadcast %cst_1 : f32 to vector<8x512xf32>
    %4 = arith.maximumf %0, %3 : vector<8x512xf32>
    %cst_2 = arith.constant -5.000000e-02 : f32
    %5 = vector.broadcast %cst_2 : f32 to vector<8x512xf32>
    %6 = arith.minimumf %0, %5 : vector<8x512xf32>
    %7 = arith.select %2, %4, %6 : vector<8x512xi1>, vector<8x512xf32>
    %cst_3 = arith.constant 1.000000e+00 : f32
    %8 = vector.broadcast %cst_3 : f32 to vector<8x512xf32>
    %9 = arith.divf %8, %7 : vector<8x512xf32>
    %cst_4 = arith.constant 6.350000e+00 : f32
    %10 = vector.broadcast %cst_4 : f32 to vector<8x512xf32>
    %11 = arith.mulf %9, %10 : vector<8x512xf32>
    %12 = math.roundeven %11 : vector<8x512xf32>
    %cst_5 = arith.constant -1.280000e+02 : f32
    %cst_6 = arith.constant 1.270000e+02 : f32
    %13 = vector.broadcast %cst_5 : f32 to vector<8x512xf32>
    %14 = arith.maximumf %13, %12 : vector<8x512xf32>
    %15 = vector.broadcast %cst_6 : f32 to vector<8x512xf32>
    %16 = arith.minimumf %15, %14 : vector<8x512xf32>
    %cst_7 = arith.constant 0.157480314 : f32
    %17 = vector.broadcast %cst_7 : f32 to vector<8x512xf32>
    %18 = arith.mulf %16, %17 : vector<8x512xf32>
    %c0_8 = arith.constant 0 : index
    %c0_9 = arith.constant 0 : index
    %19 = vector.load %arg2[%c0_8, %c0_9] : memref<8x512xf32, #tpu.memory_space<vmem>>, vector<8x512xf32>
    tpu.vector_store %arg2[%c0_8, %c0_9], %18 {strides = array<i32>} : memref<8x512xf32, #tpu.memory_space<vmem>>, vector<8x512xf32>,
    return
  }
  func.func @transform_0(%arg0: i32) -> (i32, i32) {
    %c0_i32 = arith.constant 0 : i32
    %c0_i32_0 = arith.constant 0 : i32
    return %arg0, %c0_i32 : i32, i32
  }
  func.func @transform_1(%arg0: i32) -> (i32, i32) {
    %c0_i32 = arith.constant 0 : i32
    %c0_i32_0 = arith.constant 0 : i32
    return %arg0, %c0_i32 : i32, i32
  }
}

</mosaic_0001>

<llo_original>
// kernel: tpu_custom_call.1
$region0: #{tpu_custom_call.1}
  #allocation0 [shape = 'u32[]', space=smem, size = 0x4, offset = 0x4, fixed_abs, tag = 'smem constant byte address 0x4 - core index']
  #allocation1 [shape = 'u32[144,128]{1,0:T(1,128)}', space=vmem, size = 0x12000, scoped, tag = 'internal scratch']
  %s0 = inlined_call_operand.hbm [shape: f32[8,512], index: 0, kind: input, shape index: {}]
  %s1 = inlined_call_operand.hbm [shape: f32[8,512], index: 1, kind: output, shape index: {}]
  %s2 = sld [smem:[#allocation0]]
  $region18: #{tpu_custom_call.1} parent=0
    _
  %s4 = ssub.s32 1, %s2
  %s5 = scalar_select 0, %s4, %s2
  $region1: #{tpu_custom_call.1} parent=0
    #allocation2 [shape = 'u8[16384]{0}', space=vmem, size = 0x4000, scoped, tag = 'input window, operand 0, single buffered']
    #allocation3 [shape = 's32[1]{0}', space=sflag, size = 0x4, scoped, tag = 'scoped memory for tpu_custom_call.1']
    #allocation4 [shape = 's32[1]{0}', space=sflag, size = 0x4, scoped, tag = 'scoped memory for tpu_custom_call.1']
    #allocation5 [shape = 'u8[16384]{0}', space=vmem, size = 0x4000, scoped, tag = 'output window, operand 0, single buffered']
    %6 = vsyncpa [#allocation3], 0
    %7 = vsyncpa [#allocation4], 0
    // Predicated region
    $region2: #{tpu_custom_call.1} parent=1 // pred_check
      _
    $region3: #{tpu_custom_call.1} parent=1 // pred_check_branch
      %9 = sbr.rel (0) target = $region5
    $region4: #{tpu_custom_call.1} parent=1 // pred_region
      %s11 = ssub.s32 512, 512
      %12 = vsyncadd [#allocation3], %s11
      %s14 = sshll.u32 [#allocation2], 4
      %s15 = int_to_ptr.vmem [resolvable:$true] %s14
      %17 = dma.hbm_to_vmem [thread:$0]  %s0, 512, %s15, [#allocation3]
    $region5: #{tpu_custom_call.1} parent=1 // pred_fallthru
      _
    // Predicated region
    $region6: #{tpu_custom_call.1} parent=1 // pred_check
      _
    $region7: #{tpu_custom_call.1} parent=1 // pred_check_branch
      %19 = sbr.rel (0) target = $region9
    $region8: #{tpu_custom_call.1} parent=1 // pred_region
      %20 = dma.done [#allocation3], 512
    $region9: #{tpu_custom_call.1} parent=1 // pred_fallthru
      _
    %v21 = vld [vmem:[#allocation2] sm:$0xff]
    %v22 = vld [vmem:[#allocation2 + $0x8] sm:$0xff]
    %v23 = vld [vmem:[#allocation2 + $0x10] sm:$0xff]
    %v24 = vld [vmem:[#allocation2 + $0x18] sm:$0xff]
    %vm25 = vcmp.ge.f32.partialorder %v21, 0.0
    %vm26 = vcmp.ge.f32.partialorder %v22, 0.0
    %vm27 = vcmp.ge.f32.partialorder %v23, 0.0
    %vm28 = vcmp.ge.f32.partialorder %v24, 0.0
    %v29 = vmax.f32 %v21, 0.05
    %v30 = vmax.f32 %v22, 0.05
    %v31 = vmax.f32 %v23, 0.05
    %v32 = vmax.f32 %v24, 0.05
    %v33 = vmin.f32 %v21, -0.05
    %v34 = vmin.f32 %v22, -0.05
    %v35 = vmin.f32 %v23, -0.05
    %v36 = vmin.f32 %v24, -0.05
    %v37 = vsel %vm25, %v29, %v33
    %v38 = vsel %vm26, %v30, %v34
    %v39 = vsel %vm27, %v31, %v35
    %v40 = vsel %vm28, %v32, %v36
    %v41 = vrcp.pop %v37
    %v42 = vmul.f32 1.0, %v41
    %v43 = vrcp.pop %v38
    %v44 = vmul.f32 1.0, %v43
    %v45 = vrcp.pop %v39
    %v46 = vmul.f32 1.0, %v45
    %v47 = vrcp.pop %v40
    %v48 = vmul.f32 1.0, %v47
    %v49 = vmul.f32 %v42, 6.35
    %v50 = vmul.f32 %v44, 6.35
    %v51 = vmul.f32 %v46, 6.35
    %v52 = vmul.f32 %v48, 6.35
    %v53 = vround.ne.pseudo %v49
    %v54 = vround.ne.pseudo %v50
    %v55 = vround.ne.pseudo %v51
    %v56 = vround.ne.pseudo %v52
    %v57 = vmax.f32 %v53, -128.0
    %v58 = vmax.f32 %v54, -128.0
    %v59 = vmax.f32 %v55, -128.0
    %v60 = vmax.f32 %v56, -128.0
    %v61 = vmin.f32 %v57, 127.0
    %v62 = vmin.f32 %v58, 127.0
    %v63 = vmin.f32 %v59, 127.0
    %v64 = vmin.f32 %v60, 127.0
    %v65 = vmul.f32 %v61, 0.15748031
    %v66 = vmul.f32 %v62, 0.15748031
    %v67 = vmul.f32 %v63, 0.15748031
    %v68 = vmul.f32 %v64, 0.15748031
    %69 = vst [vmem:[#allocation5] sm:$0xff] %v65
    %70 = vst [vmem:[#allocation5 + $0x8] sm:$0xff] %v66
    %71 = vst [vmem:[#allocation5 + $0x10] sm:$0xff] %v67
    %72 = vst [vmem:[#allocation5 + $0x18] sm:$0xff] %v68
    // Predicated region
    $region10: #{tpu_custom_call.1} parent=1 // pred_check
      _
    $region11: #{tpu_custom_call.1} parent=1 // pred_check_branch
      %74 = sbr.rel (0) target = $region13
    $region12: #{tpu_custom_call.1} parent=1 // pred_region
      %s76 = ssub.s32 512, 512
      %77 = vsyncadd [#allocation4], %s76
      %s79 = sshll.u32 [#allocation5], 4
      %s80 = int_to_ptr.vmem [resolvable:$true] %s79
      %82 = dma.vmem_to_hbm [thread:$0]  %s80, 512, %s1, [#allocation4]
    $region13: #{tpu_custom_call.1} parent=1 // pred_fallthru
      _
    // Predicated region
    $region14: #{tpu_custom_call.1} parent=1 // pred_check
      _
    $region15: #{tpu_custom_call.1} parent=1 // pred_check_branch
      %84 = sbr.rel (0) target = $region17
    $region16: #{tpu_custom_call.1} parent=1 // pred_region
      %85 = dma.done [#allocation4], 512
    $region17: #{tpu_custom_call.1} parent=1 // pred_fallthru
      _
    %86 = vsyncpa [#allocation3], 1
    %87 = vsyncpa [#allocation4], 1

</llo_original>
